<compile_context>
chip_gen: v5e
topology: v5e:2x2
jax: 0.10.0
libtpu: 0.0.40
codegen_flags: <defaults>
</compile_context>

<pallas_src>
import functools

import jax
import jax.numpy as jnp
from jax.experimental import pallas as pl
from jax.experimental.pallas import tpu as pltpu


def mlp_kernel(xt_ref, w1t_ref, b1_ref, w2_ref, b2_ref, o_ref):
    # fc1: (H, in) @ (in, TB) -> (H, TB); batch on lanes, f32 accumulation.
    h = jnp.dot(w1t_ref[...], xt_ref[...], preferred_element_type=jnp.float32)
    h = jnp.maximum(h + b1_ref[...], 0.0)                 # bias + ReLU (VPU)
    # fc2 with out_features = 1: elementwise multiply + sublane reduction
    # (XLU) instead of an N=1 MXU matmul; result (1, TB) is lane-dense.
    y = jnp.sum(h * w2_ref[...], axis=0, keepdims=True) + b2_ref[0]
    o_ref[...] = jax.nn.sigmoid(y).astype(o_ref.dtype)


@functools.partial(jax.jit, static_argnames=("tb",))
def simple_nn_forward(x, w1, b1, w2, b2, *, tb=512):
    """y = sigmoid(relu(x @ w1 + b1) @ w2 + b2); returns shape (B, 1)."""
    B, in_size = x.shape
    H = w1.shape[1]

    # Lane-aligned batch tile: multiple of 128, capped at `tb` (512 default;
    # halve on v7x if VMEM-limited at large in_size/H).
    tile_b = min(tb, max(128, ((B + 127) // 128) * 128))
    grid_b = pl.cdiv(B, tile_b)
    b_pad = grid_b * tile_b

    # Wrapper-side layout plumbing: put batch on the lane axis.
    xt = jnp.pad(x, ((0, b_pad - B), (0, 0))).T           # (in, B_pad)
    w1t = w1.T                                            # (H, in)  resident
    b1c = b1.reshape(H, 1)                                # (H, 1)   resident
    w2c = w2.reshape(H, 1)                                # (H, 1)   resident
    b2s = b2.reshape(1)                                   # scalar -> SMEM

    cost = pl.CostEstimate(
        flops=2 * b_pad * in_size * H + 2 * b_pad * H,
        transcendentals=b_pad,
        bytes_accessed=(b_pad * in_size + in_size * H + 2 * H + 1 + b_pad) * 4,
    )

    out = pl.pallas_call(
        mlp_kernel,
        out_shape=jax.ShapeDtypeStruct((1, b_pad), jnp.float32),
        grid=(grid_b,),
        in_specs=[
            pl.BlockSpec((in_size, tile_b), lambda i: (0, i),
                         memory_space=pltpu.MemorySpace.VMEM),
            pl.BlockSpec((H, in_size), lambda i: (0, 0),
                         memory_space=pltpu.MemorySpace.VMEM),
            pl.BlockSpec((H, 1), lambda i: (0, 0),
                         memory_space=pltpu.MemorySpace.VMEM),
            pl.BlockSpec((H, 1), lambda i: (0, 0),
                         memory_space=pltpu.MemorySpace.VMEM),
            pl.BlockSpec(memory_space=pltpu.MemorySpace.SMEM),
        ],
        out_specs=pl.BlockSpec((1, tile_b), lambda i: (0, i),
                               memory_space=pltpu.MemorySpace.VMEM),
        compiler_params=pltpu.CompilerParams(
            dimension_semantics=("parallel",)),
        cost_estimate=cost,
    )(xt, w1t, b1c, w2c, b2s)

    # Back to PyTorch layout (B, 1); drop batch padding.
    return out[0, :B].reshape(B, 1)


def init_params(key, input_size, hidden_size):
    # Deterministic init mirroring PyTorch nn.Linear default:
    # U(-1/sqrt(fan_in), 1/sqrt(fan_in)) for both weight and bias.
    k1, k2, k3, k4 = jax.random.split(key, 4)
    bound1 = 1.0 / (input_size ** 0.5)
    bound2 = 1.0 / (hidden_size ** 0.5)
    w1 = jax.random.uniform(k1, (input_size, hidden_size), jnp.float32,
                            -bound1, bound1)
    b1 = jax.random.uniform(k2, (hidden_size,), jnp.float32, -bound1, bound1)
    w2 = jax.random.uniform(k3, (hidden_size, 1), jnp.float32, -bound2, bound2)
    b2 = jax.random.uniform(k4, (1,), jnp.float32, -bound2, bound2)
    return w1, b1, w2, b2


if __name__ == "__main__":
    key = jax.random.PRNGKey(0)
    batch, input_size, hidden_size = 8, 16, 32

    kx, kp = jax.random.split(key)
    x = jax.random.normal(kx, (batch, input_size), jnp.float32)
    w1, b1, w2, b2 = init_params(kp, input_size, hidden_size)

    out = simple_nn_forward(x, w1, b1, w2, b2)
    out = jax.block_until_ready(out)

    # Pure-JAX reference check of the forward semantics.
    ref = jax.nn.sigmoid(jnp.maximum(x @ w1 + b1, 0.0) @ w2 + b2)
    assert out.shape == (batch, 1)
    assert jnp.allclose(out, ref, atol=1e-5, rtol=1e-5)

    print("KERNEL_OK")
</pallas_src>

<mosaic_0001>
module attributes {stable_mosaic.version = 11 : i64} {
  func.func @mlp_kernel(%arg0: i32, %arg1: memref<16x128xf32, #tpu.memory_space<vmem>>, %arg2: memref<32x16xf32, #tpu.memory_space<vmem>>, %arg3: memref<32x1xf32, #tpu.memory_space<vmem>>, %arg4: memref<32x1xf32, #tpu.memory_space<vmem>>, %arg5: memref<1xf32, #tpu.memory_space<smem>>, %arg6: memref<1x128xf32, #tpu.memory_space<vmem>>) attributes {dimension_semantics = [#tpu.dimension_semantics<parallel>], iteration_bounds = array<i64: 1>, scalar_prefetch = 0 : i64, scratch_operands = 0 : i64, tpu.core_type = #tpu.core_type<tc>, window_params = [{transform_indices = @transform_0, window_bounds = array<i64: 16, 128>}, {pipeline_mode = #tpu.pipeline_mode<synchronous>, transform_indices = @transform_1, window_bounds = array<i64: 32, 16>}, {pipeline_mode = #tpu.pipeline_mode<synchronous>, transform_indices = @transform_2, window_bounds = array<i64: 32, 1>}, {pipeline_mode = #tpu.pipeline_mode<synchronous>, transform_indices = @transform_3, window_bounds = array<i64: 32, 1>}, {transform_indices = @transform_4, window_bounds = array<i64: 1>}, {transform_indices = @transform_5, window_bounds = array<i64: 1, 128>}]} {
    %c0 = arith.constant 0 : index
    %c0_0 = arith.constant 0 : index
    %0 = vector.load %arg2[%c0, %c0_0] : memref<32x16xf32, #tpu.memory_space<vmem>>, vector<32x16xf32>
    %c0_1 = arith.constant 0 : index
    %c0_2 = arith.constant 0 : index
    %1 = vector.load %arg1[%c0_1, %c0_2] : memref<16x128xf32, #tpu.memory_space<vmem>>, vector<16x128xf32>
    %cst = arith.constant dense<0.000000e+00> : vector<32x128xf32>
    %2 = tpu.matmul %0, %1, %cst {dimension_numbers = #tpu.dot_dimension_numbers<[1], [0], [0], [1], [0, 0, 1, 1], [], []>} : vector<32x16xf32>, vector<16x128xf32>, vector<32x128xf32> -> vector<32x128xf32>
    %c0_3 = arith.constant 0 : index
    %c0_4 = arith.constant 0 : index
    %3 = vector.load %arg3[%c0_3, %c0_4] : memref<32x1xf32, #tpu.memory_space<vmem>>, vector<32x1xf32>
    %4 = vector.broadcast %3 : vector<32x1xf32> to vector<32x128xf32>
    %5 = arith.addf %2, %4 : vector<32x128xf32>
    %cst_5 = arith.constant 0.000000e+00 : f32
    %6 = vector.broadcast %cst_5 : f32 to vector<32x128xf32>
    %7 = arith.maximumf %5, %6 : vector<32x128xf32>
    %c0_6 = arith.constant 0 : index
    %c0_7 = arith.constant 0 : index
    %8 = vector.load %arg4[%c0_6, %c0_7] : memref<32x1xf32, #tpu.memory_space<vmem>>, vector<32x1xf32>
    %9 = vector.broadcast %8 : vector<32x1xf32> to vector<32x128xf32>
    %10 = arith.mulf %7, %9 : vector<32x128xf32>
    %cst_8 = arith.constant dense<0.000000e+00> : vector<128xf32>
    %11 = vector.multi_reduction <add>, %10, %cst_8 [0] : vector<32x128xf32> to vector<128xf32>
    %12 = vector.shape_cast %11 : vector<128xf32> to vector<1x128xf32>
    %c0_9 = arith.constant 0 : index
    %13 = memref.load %arg5[%c0_9] : memref<1xf32, #tpu.memory_space<smem>>
    %14 = vector.broadcast %13 : f32 to vector<1x128xf32>
    %15 = arith.addf %12, %14 : vector<1x128xf32>
    %16 = arith.negf %15 : vector<1x128xf32>
    %17 = math.exp %16 : vector<1x128xf32>
    %cst_10 = arith.constant 1.000000e+00 : f32
    %18 = vector.broadcast %cst_10 : f32 to vector<1x128xf32>
    %19 = arith.addf %18, %17 : vector<1x128xf32>
    %20 = arith.divf %18, %19 : vector<1x128xf32>
    %c0_11 = arith.constant 0 : index
    %c0_12 = arith.constant 0 : index
    %21 = vector.load %arg6[%c0_11, %c0_12] : memref<1x128xf32, #tpu.memory_space<vmem>>, vector<1x128xf32>
    tpu.vector_store %arg6[%c0_11, %c0_12], %20 {strides = array<i32>} : memref<1x128xf32, #tpu.memory_space<vmem>>, vector<1x128xf32>,
    return
  }
  func.func @transform_0(%arg0: i32) -> (i32, i32) {
    %c0_i32 = arith.constant 0 : i32
    %c0_i32_0 = arith.constant 0 : i32
    return %c0_i32, %arg0 : i32, i32
  }
  func.func @transform_1(%arg0: i32) -> (i32, i32) {
    %c0_i32 = arith.constant 0 : i32
    %c0_i32_0 = arith.constant 0 : i32
    %c0_i32_1 = arith.constant 0 : i32
    return %c0_i32, %c0_i32_0 : i32, i32
  }
  func.func @transform_2(%arg0: i32) -> (i32, i32) {
    %c0_i32 = arith.constant 0 : i32
    %c0_i32_0 = arith.constant 0 : i32
    %c0_i32_1 = arith.constant 0 : i32
    return %c0_i32, %c0_i32_0 : i32, i32
  }
  func.func @transform_3(%arg0: i32) -> (i32, i32) {
    %c0_i32 = arith.constant 0 : i32
    %c0_i32_0 = arith.constant 0 : i32
    %c0_i32_1 = arith.constant 0 : i32
    return %c0_i32, %c0_i32_0 : i32, i32
  }
  func.func @transform_4(%arg0: i32) -> i32 {
    %c0_i32 = arith.constant 0 : i32
    %c0_i32_0 = arith.constant 0 : i32
    return %c0_i32 : i32
  }
  func.func @transform_5(%arg0: i32) -> (i32, i32) {
    %c0_i32 = arith.constant 0 : i32
    %c0_i32_0 = arith.constant 0 : i32
    return %c0_i32, %arg0 : i32, i32
  }
}

</mosaic_0001>

<llo_original>
// kernel: simple_nn_forward.1
$region0: #{simple_nn_forward.1}
  #allocation0 [shape = 'u32[]', space=smem, size = 0x4, offset = 0x4, fixed_abs, tag = 'smem constant byte address 0x4 - core index']
  #allocation1 [shape = 'u32[72,128]{1,0:T(1,128)}', space=vmem, size = 0x9000, scoped, tag = 'internal scratch']
  #allocation2 [shape = 'f32[1]{0:T(128)S(6)}', space=smem, size = 0x200, scoped, tag = 'scoped memory for simple_nn_forward.1']
  %s0 = inlined_call_operand.vmem [shape: f32[16,128], index: 0, kind: input, shape index: {}]
  %s1 = inlined_call_operand.vmem [shape: f32[32,16], index: 1, kind: input, shape index: {}]
  %s2 = inlined_call_operand.vmem [shape: f32[32,1], index: 2, kind: input, shape index: {}]
  %s3 = inlined_call_operand.vmem [shape: f32[32,1], index: 3, kind: input, shape index: {}]
  %s4 = inlined_call_operand.<no memory space> [shape: f32[1], index: 4, kind: input, shape index: {}]
  %s5 = inlined_call_operand.vmem [shape: f32[1,128], index: 5, kind: output, shape index: {}]
  %s6 = sld [smem:[#allocation0]]
  $region30: #{simple_nn_forward.1} parent=0
    _
  %s8 = ssub.s32 1, %s6
  %s9 = scalar_select 0, %s8, %s6
  %10 = sst [smem:[#allocation2]] %s4
  // Predicated region
  $region2: #{simple_nn_forward.1} parent=0 // pred_check
    _
  $region3: #{simple_nn_forward.1} parent=0 // pred_check_branch
    %12 = sbr.rel (0) target = $region5
  $region4: #{simple_nn_forward.1} parent=0 // pred_region
    _
  $region5: #{simple_nn_forward.1} parent=0 // pred_fallthru
    _
  // Predicated region
  $region6: #{simple_nn_forward.1} parent=0 // pred_check
    _
  $region7: #{simple_nn_forward.1} parent=0 // pred_check_branch
    %14 = sbr.rel (0) target = $region9
  $region8: #{simple_nn_forward.1} parent=0 // pred_region
    _
  $region9: #{simple_nn_forward.1} parent=0 // pred_fallthru
    _
  // Predicated region
  $region10: #{simple_nn_forward.1} parent=0 // pred_check
    _
  $region11: #{simple_nn_forward.1} parent=0 // pred_check_branch
    %16 = sbr.rel (0) target = $region13
  $region12: #{simple_nn_forward.1} parent=0 // pred_region
    _
  $region13: #{simple_nn_forward.1} parent=0 // pred_fallthru
    _
  // Predicated region
  $region14: #{simple_nn_forward.1} parent=0 // pred_check
    _
  $region15: #{simple_nn_forward.1} parent=0 // pred_check_branch
    %18 = sbr.rel (0) target = $region17
  $region16: #{simple_nn_forward.1} parent=0 // pred_region
    _
  $region17: #{simple_nn_forward.1} parent=0 // pred_fallthru
    _
  // Predicated region
  $region18: #{simple_nn_forward.1} parent=0 // pred_check
    _
  $region19: #{simple_nn_forward.1} parent=0 // pred_check_branch
    %20 = sbr.rel (0) target = $region21
  $region20: #{simple_nn_forward.1} parent=0 // pred_region
    _
  $region21: #{simple_nn_forward.1} parent=0 // pred_fallthru
    _
  %v21 = vld [vmem:[%s1] sm:$0xff]
  %v22 = vld [vmem:[%s1 + $0x8] sm:$0xff]
  %v23 = vld [vmem:[%s1 + $0x10] sm:$0xff]
  %v24 = vld [vmem:[%s1 + $0x18] sm:$0xff]
  %v25 = vld [vmem:[%s0] sm:$0xff]
  %v26 = vld [vmem:[%s0 + $0x8] sm:$0xff]
  %v27 = vld [vmem:[%s2] sm:$0xff]
  %v28 = vld [vmem:[%s2 + $0x8] sm:$0xff]
  %v29 = vld [vmem:[%s2 + $0x10] sm:$0xff]
  %v30 = vld [vmem:[%s2 + $0x18] sm:$0xff]
  %32 = vset.pattern.permute.xlu0 0
  %33 = vperm.xlu0 %32, %v27
  %v34 = vpop.permute.xlu0 %33
  %37 = vset.pattern.permute.xlu0 0
  %38 = vperm.xlu0 %37, %v28
  %v39 = vpop.permute.xlu0 %38
  %42 = vset.pattern.permute.xlu0 0
  %43 = vperm.xlu0 %42, %v29
  %v44 = vpop.permute.xlu0 %43
  %47 = vset.pattern.permute.xlu0 0
  %48 = vperm.xlu0 %47, %v30
  %v49 = vpop.permute.xlu0 %48
  %vm51 = vcmask 130048
  %v53 = vsel %vm51, %v21, 0
  %v56 = vsel %vm51, %v22, 0
  %v59 = vsel %vm51, %v23, 0
  %v62 = vsel %vm51, %v24, 0
  %64 = vmatpush.msra.mxu0 0.0
  %65 = vmatpush.msra.mxu0 0.0
  %66 = vmatpush.msra.mxu0 0.0
  %67 = vmatpush.msra.mxu0 0.0
  %68 = vmatpush.msra.mxu0 0.0
  %69 = vmatpush.msra.mxu0 0.0
  %70 = vmatpush.msra.mxu0 0.0
  %71 = vmatpush.msra.mxu0 0.0
  %72 = vmatpush.msra.mxu0 0.0
  %73 = vmatpush.msra.mxu0 0.0
  %74 = vmatpush.msra.mxu0 0.0
  %75 = vmatpush.msra.mxu0 0.0
  %76 = vmatpush.msra.mxu0 0.0
  %77 = vmatpush.msra.mxu0 0.0
  %78 = vmatpush.msra.mxu0 %v26
  %79 = vmatpush.msra.mxu0 %v25
  %80 = vmatmul.f32.gmra.mxu0 %v53
  %v81 = vpop.f32.mrf.mxu0
  %v82 = vadd.f32 %v34, %v81
  %83 = vmatmul.f32.gmra.mxu0 %v56
  %v84 = vpop.f32.mrf.mxu0
  %v85 = vadd.f32 %v39, %v84
  %86 = vmatmul.f32.gmra.mxu0 %v59
  %v87 = vpop.f32.mrf.mxu0
  %v88 = vadd.f32 %v44, %v87
  %89 = vmatmul.f32.gmra.mxu0 %v62
  %v90 = vpop.f32.mrf.mxu0
  %v91 = vadd.f32 %v49, %v90
  %92 = vdwg.mxu0
  %v93 = vmax.f32 %v82, 0.0
  %v94 = vmax.f32 %v85, 0.0
  %v95 = vmax.f32 %v88, 0.0
  %v96 = vmax.f32 %v91, 0.0
  %v97 = vld [vmem:[%s3] sm:$0xff]
  %v98 = vld [vmem:[%s3 + $0x8] sm:$0xff]
  %v99 = vld [vmem:[%s3 + $0x10] sm:$0xff]
  %v100 = vld [vmem:[%s3 + $0x18] sm:$0xff]
  %102 = vset.pattern.permute.xlu0 0
  %103 = vperm.xlu0 %102, %v97
  %v104 = vpop.permute.xlu0 %103
  %107 = vset.pattern.permute.xlu0 0
  %108 = vperm.xlu0 %107, %v98
  %v109 = vpop.permute.xlu0 %108
  %112 = vset.pattern.permute.xlu0 0
  %113 = vperm.xlu0 %112, %v99
  %v114 = vpop.permute.xlu0 %113
  %117 = vset.pattern.permute.xlu0 0
  %118 = vperm.xlu0 %117, %v100
  %v119 = vpop.permute.xlu0 %118
  %v121 = vmul.f32 %v93, %v104
  %v122 = vmul.f32 %v94, %v109
  %v123 = vmul.f32 %v95, %v114
  %v124 = vmul.f32 %v96, %v119
  %v125 = vadd.f32 %v121, %v122
  %v126 = vadd.f32 %v125, %v123
  %v127 = vadd.f32 %v126, %v124
  %v128 = vrot.slane %v127, 4
  %v129 = vadd.f32 %v127, %v128
  %v130 = vrot.slane %v129, 2
  %v131 = vadd.f32 %v129, %v130
  %v132 = vrot.slane %v131, 1
  %v133 = vadd.f32 %v131, %v132
  %s134 = sld [smem:[#allocation2]]
  %v135 = vstv %s134
  %v136 = vadd.f32 %v133, %v135
  %v137 = vxor.u32 %v136, 2147483648
  %v138 = vmul.f32 %v137, 1.442695
  %v139 = vpow.pop %v138
  %v140 = vadd.f32 %v139, 1.0
  %v141 = vrcp.pop %v140
  %v142 = vmul.f32 %v140, %v141
  %v143 = vsub.f32 1.0, %v142
  %v144 = vmul.f32 %v141, %v143
  %v145 = vadd.f32 %v141, %v144
  %vm146 = vweird.f32 %v140
  %vm147 = vweird.f32 %v141
  %vm148 = vmor %vm146, %vm147
  %v149 = vsel %vm148, %v141, %v145
  %v150 = vand.u32 2147483647, %v140
  %vm151 = vcmp.eq.f32.partialorder %v150, 8.507059e+37
  %v152 = vand.u32 %v140, 2147483648
  %v153 = vor.u32 1.1754944e-38, %v152
  %v154 = vsel %vm151, %v153, %v149
  %v155 = vmul.f32 1.0, %v154
  %156 = vst [vmem:[%s5] sm:$0x1] %v155
  // Predicated region
  $region22: #{simple_nn_forward.1} parent=0 // pred_check
    _
  $region23: #{simple_nn_forward.1} parent=0 // pred_check_branch
    %158 = sbr.rel (0) target = $region25
  $region24: #{simple_nn_forward.1} parent=0 // pred_region
    _
  $region25: #{simple_nn_forward.1} parent=0 // pred_fallthru
    _
  // Predicated region
  $region26: #{simple_nn_forward.1} parent=0 // pred_check
    _
  $region27: #{simple_nn_forward.1} parent=0 // pred_check_branch
    %160 = sbr.rel (0) target = $region29
  $region28: #{simple_nn_forward.1} parent=0 // pred_region
    _
  $region29: #{simple_nn_forward.1} parent=0 // pred_fallthru
    _

</llo_original>
